<compile_context>
chip_gen: v7x
topology: tpu7x:2x2x1
jax: 0.10.0
libtpu: 0.0.40
codegen_flags: <defaults>
</compile_context>

<pallas_src>
import jax
import jax.numpy as jnp
from jax.experimental import pallas as pl
from jax.experimental.pallas import tpu as pltpu


def mca_kernel(x_re_ref, x_im_ref, wd_ref, bd_ref, wu_ref, bu_ref,
               o_re_ref, o_im_ref):
    # x_*_ref : (Nb, C, HW)   batch-block tile (spatial on lanes)
    # wd_ref  : (2, Cr, C)    conv_down weight, [0]=re, [1]=im
    # bd_ref  : (2, 1, Cr)    conv_down bias
    # wu_ref  : (2, C, Cr)    conv_up weight (native PyTorch (C, Cr) layout)
    # bu_ref  : (2, 1, C)     conv_up bias
    x_re = x_re_ref[...]                       # (Nb, C, HW)
    x_im = x_im_ref[...]
    inv_hw = 1.0 / x_re.shape[-1]

    # ---- adaptive average pool to 1x1 (lane reduction over spatial) ----
    p_re = jnp.sum(x_re, axis=-1) * inv_hw     # (Nb, C)
    p_im = jnp.sum(x_im, axis=-1) * inv_hw

    # ---- complex 1x1 conv down: (Nb, C) -> (Nb, Cr) ----
    wd_re = wd_ref[0][None]                    # (1, Cr, C)
    wd_im = wd_ref[1][None]
    pr = p_re[:, None, :]                      # (Nb, 1, C)
    pi = p_im[:, None, :]
    d_re = jnp.sum(wd_re * pr - wd_im * pi, axis=-1) + bd_ref[0]   # (Nb, Cr)
    d_im = jnp.sum(wd_re * pi + wd_im * pr, axis=-1) + bd_ref[1]

    # ---- CReLU: ReLU on real and imaginary parts independently ----
    d_re = jnp.maximum(d_re, 0.0)
    d_im = jnp.maximum(d_im, 0.0)

    # ---- complex 1x1 conv up: (Nb, Cr) -> (Nb, C) ----
    wu_re = wu_ref[0][None]                    # (1, C, Cr)
    wu_im = wu_ref[1][None]
    dr = d_re[:, None, :]                      # (Nb, 1, Cr)
    di = d_im[:, None, :]
    a_re = jnp.sum(wu_re * dr - wu_im * di, axis=-1) + bu_ref[0]   # (Nb, C)
    a_im = jnp.sum(wu_re * di + wu_im * dr, axis=-1) + bu_ref[1]

    # ---- ComplexRatioMask: sigmoid(|a|) * exp(j*angle(a)) ----
    mag = jnp.sqrt(a_re * a_re + a_im * a_im)
    sig = jax.nn.sigmoid(mag)
    nz = mag > 0.0
    scale = jnp.where(nz, sig / jnp.where(nz, mag, 1.0), 0.0)
    m_re = jnp.where(nz, a_re * scale, sig)[:, :, None]   # angle(0)=0 -> sigmoid(0)
    m_im = (a_im * scale)[:, :, None]                     # (Nb, C, 1)

    # ---- apply mask: complex multiply, lane-dense stores ----
    o_re_ref[...] = x_re * m_re - x_im * m_im
    o_im_ref[...] = x_re * m_im + x_im * m_re


def _choose_batch_block(n, c, hw):
    """Pick batches-per-block: big enough to amortize per-step overhead, small
    enough that the double-buffered 4-stream footprint stays well under VMEM."""
    per_batch = c * hw * 4                  # one f32 array, one batch element
    target = 512 * 1024                     # aim for >= 512 KiB per-array block
    cap = 2 * 1024 * 1024                   # 4 streams x 2 buffers -> <= ~16 MiB
    nb = 1
    for cand in range(1, n + 1):
        if n % cand:
            continue
        if cand * per_batch > cap:
            break
        nb = cand
        if cand * per_batch >= target:
            break
    return nb


def masked_channel_attention(x_re, x_im,
                             wd_re, wd_im, bd_re, bd_im,
                             wu_re, wu_im, bu_re, bu_im):
    """x_*: (N, C, H, W) f32.  wd: (Cr, C), wu: (C, Cr), biases (Cr,) / (C,)."""
    N, C, H, W = x_re.shape
    Cr = wd_re.shape[0]
    HW = H * W

    # Pure reshapes of the native NCHW layout (no transpose, no extra HBM pass).
    xr = x_re.reshape(N, C, HW)
    xi = x_im.reshape(N, C, HW)

    # Pack the tiny weight/bias streams: re/im stacked on a leading axis.
    wd = jnp.stack([wd_re, wd_im])                        # (2, Cr, C)
    wu = jnp.stack([wu_re, wu_im])                        # (2, C, Cr)
    bd = jnp.stack([bd_re, bd_im]).reshape(2, 1, Cr)      # (2, 1, Cr)
    bu = jnp.stack([bu_re, bu_im]).reshape(2, 1, C)       # (2, 1, C)

    nb = _choose_batch_block(N, C, HW)

    xspec = pl.BlockSpec((nb, C, HW), lambda n: (n, 0, 0))
    wdspec = pl.BlockSpec((2, Cr, C), lambda n: (0, 0, 0))
    wuspec = pl.BlockSpec((2, C, Cr), lambda n: (0, 0, 0))
    bdspec = pl.BlockSpec((2, 1, Cr), lambda n: (0, 0, 0))
    buspec = pl.BlockSpec((2, 1, C), lambda n: (0, 0, 0))

    x_bytes = N * C * HW * 4
    cost = pl.CostEstimate(
        flops=10 * N * C * HW,              # pool + mask-apply (tiny convs ignored)
        transcendentals=2 * N * C,          # sigmoid
        bytes_accessed=4 * x_bytes + 2 * (wd.size + wu.size + bd.size + bu.size) * 4,
    )

    out_re3, out_im3 = pl.pallas_call(
        mca_kernel,
        out_shape=(jax.ShapeDtypeStruct((N, C, HW), jnp.float32),
                   jax.ShapeDtypeStruct((N, C, HW), jnp.float32)),
        grid=(N // nb,),
        in_specs=[xspec, xspec, wdspec, bdspec, wuspec, buspec],
        out_specs=(xspec, xspec),
        compiler_params=pltpu.CompilerParams(
            dimension_semantics=("parallel",),
            vmem_limit_bytes=32 * 1024 * 1024,
        ),
        cost_estimate=cost,
    )(xr, xi, wd, bd, wu, bu)

    return out_re3.reshape(N, C, H, W), out_im3.reshape(N, C, H, W)


def mca_reference(x_re, x_im, wd_re, wd_im, bd_re, bd_im, wu_re, wu_im, bu_re, bu_im):
    """Pure-JAX reference (real/imag arithmetic), mirrors the PyTorch forward."""
    p_re = jnp.mean(x_re, axis=(2, 3))          # (N, C)
    p_im = jnp.mean(x_im, axis=(2, 3))
    d_re = p_re @ wd_re.T - p_im @ wd_im.T + bd_re
    d_im = p_re @ wd_im.T + p_im @ wd_re.T + bd_im
    d_re = jnp.maximum(d_re, 0.0)
    d_im = jnp.maximum(d_im, 0.0)
    a_re = d_re @ wu_re.T - d_im @ wu_im.T + bu_re
    a_im = d_re @ wu_im.T + d_im @ wu_re.T + bu_im
    mag = jnp.sqrt(a_re ** 2 + a_im ** 2)
    sig = jax.nn.sigmoid(mag)
    nz = mag > 0.0
    scale = jnp.where(nz, sig / jnp.where(nz, mag, 1.0), 0.0)
    m_re = jnp.where(nz, a_re * scale, sig)[:, :, None, None]
    m_im = (a_im * scale)[:, :, None, None]
    return x_re * m_re - x_im * m_im, x_re * m_im + x_im * m_re


if __name__ == "__main__":
    key = jax.random.PRNGKey(0)
    N, C, H, W = 2, 4, 16, 16
    reduction_factor = 2
    Cr = C // reduction_factor

    ks = jax.random.split(key, 10)
    # complex input z = x_re + j*x_im
    x_re = jax.random.normal(ks[0], (N, C, H, W), jnp.float32)
    x_im = jax.random.normal(ks[1], (N, C, H, W), jnp.float32)
    # conv_down: complex Conv(C -> Cr, kernel_size=1); weights (Cr, C), bias (Cr,)
    wd_re = 0.5 * jax.random.normal(ks[2], (Cr, C), jnp.float32)
    wd_im = 0.5 * jax.random.normal(ks[3], (Cr, C), jnp.float32)
    bd_re = 0.1 * jax.random.normal(ks[4], (Cr,), jnp.float32)
    bd_im = 0.1 * jax.random.normal(ks[5], (Cr,), jnp.float32)
    # conv_up: complex Conv(Cr -> C, kernel_size=1); weights (C, Cr), bias (C,)
    wu_re = 0.5 * jax.random.normal(ks[6], (C, Cr), jnp.float32)
    wu_im = 0.5 * jax.random.normal(ks[7], (C, Cr), jnp.float32)
    bu_re = 0.1 * jax.random.normal(ks[8], (C,), jnp.float32)
    bu_im = 0.1 * jax.random.normal(ks[9], (C,), jnp.float32)

    out_re, out_im = masked_channel_attention(
        x_re, x_im, wd_re, wd_im, bd_re, bd_im, wu_re, wu_im, bu_re, bu_im)
    jax.block_until_ready((out_re, out_im))

    ref_re, ref_im = mca_reference(
        x_re, x_im, wd_re, wd_im, bd_re, bd_im, wu_re, wu_im, bu_re, bu_im)

    assert out_re.shape == (N, C, H, W) and out_im.shape == (N, C, H, W)
    assert jnp.allclose(out_re, ref_re, atol=1e-4, rtol=1e-4)
    assert jnp.allclose(out_im, ref_im, atol=1e-4, rtol=1e-4)
    print("KERNEL_OK")
</pallas_src>

<mosaic_0001>
module attributes {stable_mosaic.version = 11 : i64} {
  func.func @mca_kernel(%arg0: i32, %arg1: memref<2x4x256xf32, #tpu.memory_space<vmem>>, %arg2: memref<2x4x256xf32, #tpu.memory_space<vmem>>, %arg3: memref<2x2x4xf32, #tpu.memory_space<vmem>>, %arg4: memref<2x1x2xf32, #tpu.memory_space<vmem>>, %arg5: memref<2x4x2xf32, #tpu.memory_space<vmem>>, %arg6: memref<2x1x4xf32, #tpu.memory_space<vmem>>, %arg7: memref<2x4x256xf32, #tpu.memory_space<vmem>>, %arg8: memref<2x4x256xf32, #tpu.memory_space<vmem>>) attributes {dimension_semantics = [#tpu.dimension_semantics<parallel>], iteration_bounds = array<i64: 1>, scalar_prefetch = 0 : i64, scratch_operands = 0 : i64, tpu.core_type = #tpu.core_type<tc>, window_params = [{transform_indices = @transform_0, window_bounds = array<i64: 2, 4, 256>}, {transform_indices = @transform_1, window_bounds = array<i64: 2, 4, 256>}, {pipeline_mode = #tpu.pipeline_mode<synchronous>, transform_indices = @transform_2, window_bounds = array<i64: 2, 2, 4>}, {pipeline_mode = #tpu.pipeline_mode<synchronous>, transform_indices = @transform_3, window_bounds = array<i64: 2, 1, 2>}, {pipeline_mode = #tpu.pipeline_mode<synchronous>, transform_indices = @transform_4, window_bounds = array<i64: 2, 4, 2>}, {pipeline_mode = #tpu.pipeline_mode<synchronous>, transform_indices = @transform_5, window_bounds = array<i64: 2, 1, 4>}, {transform_indices = @transform_6, window_bounds = array<i64: 2, 4, 256>}, {transform_indices = @transform_7, window_bounds = array<i64: 2, 4, 256>}]} {
    %c0 = arith.constant 0 : index
    %c0_0 = arith.constant 0 : index
    %c0_1 = arith.constant 0 : index
    %0 = vector.load %arg1[%c0, %c0_0, %c0_1] : memref<2x4x256xf32, #tpu.memory_space<vmem>>, vector<2x4x256xf32>
    %c0_2 = arith.constant 0 : index
    %c0_3 = arith.constant 0 : index
    %c0_4 = arith.constant 0 : index
    %1 = vector.load %arg2[%c0_2, %c0_3, %c0_4] : memref<2x4x256xf32, #tpu.memory_space<vmem>>, vector<2x4x256xf32>
    %cst = arith.constant dense<0.000000e+00> : vector<2x4xf32>
    %2 = vector.multi_reduction <add>, %0, %cst [2] : vector<2x4x256xf32> to vector<2x4xf32>
    %cst_5 = arith.constant 3.906250e-03 : f32
    %3 = vector.broadcast %cst_5 : f32 to vector<2x4xf32>
    %4 = arith.mulf %2, %3 : vector<2x4xf32>
    %cst_6 = arith.constant dense<0.000000e+00> : vector<2x4xf32>
    %5 = vector.multi_reduction <add>, %1, %cst_6 [2] : vector<2x4x256xf32> to vector<2x4xf32>
    %cst_7 = arith.constant 3.906250e-03 : f32
    %6 = vector.broadcast %cst_7 : f32 to vector<2x4xf32>
    %7 = arith.mulf %5, %6 : vector<2x4xf32>
    %c0_8 = arith.constant 0 : index
    %c0_9 = arith.constant 0 : index
    %c0_10 = arith.constant 0 : index
    %8 = vector.load %arg3[%c0_8, %c0_9, %c0_10] : memref<2x2x4xf32, #tpu.memory_space<vmem>>, vector<1x2x4xf32>
    %9 = vector.shape_cast %8 : vector<1x2x4xf32> to vector<2x4xf32>
    %10 = vector.shape_cast %9 : vector<2x4xf32> to vector<1x2x4xf32>
    %c1 = arith.constant 1 : index
    %c0_11 = arith.constant 0 : index
    %c0_12 = arith.constant 0 : index
    %11 = vector.load %arg3[%c1, %c0_11, %c0_12] : memref<2x2x4xf32, #tpu.memory_space<vmem>>, vector<1x2x4xf32>
    %12 = vector.shape_cast %11 : vector<1x2x4xf32> to vector<2x4xf32>
    %13 = vector.shape_cast %12 : vector<2x4xf32> to vector<1x2x4xf32>
    %14 = vector.shape_cast %4 : vector<2x4xf32> to vector<2x1x4xf32>
    %15 = vector.shape_cast %7 : vector<2x4xf32> to vector<2x1x4xf32>
    %16 = vector.broadcast %10 : vector<1x2x4xf32> to vector<2x2x4xf32>
    %17 = vector.broadcast %14 : vector<2x1x4xf32> to vector<2x2x4xf32>
    %18 = arith.mulf %16, %17 : vector<2x2x4xf32>
    %19 = vector.broadcast %13 : vector<1x2x4xf32> to vector<2x2x4xf32>
    %20 = vector.broadcast %15 : vector<2x1x4xf32> to vector<2x2x4xf32>
    %21 = arith.mulf %19, %20 : vector<2x2x4xf32>
    %22 = arith.subf %18, %21 : vector<2x2x4xf32>
    %cst_13 = arith.constant dense<0.000000e+00> : vector<2x2xf32>
    %23 = vector.multi_reduction <add>, %22, %cst_13 [2] : vector<2x2x4xf32> to vector<2x2xf32>
    %c0_14 = arith.constant 0 : index
    %c0_15 = arith.constant 0 : index
    %c0_16 = arith.constant 0 : index
    %24 = vector.load %arg4[%c0_14, %c0_15, %c0_16] : memref<2x1x2xf32, #tpu.memory_space<vmem>>, vector<1x1x2xf32>
    %25 = vector.shape_cast %24 : vector<1x1x2xf32> to vector<1x2xf32>
    %26 = vector.broadcast %25 : vector<1x2xf32> to vector<2x2xf32>
    %27 = arith.addf %23, %26 : vector<2x2xf32>
    %28 = vector.broadcast %10 : vector<1x2x4xf32> to vector<2x2x4xf32>
    %29 = vector.broadcast %15 : vector<2x1x4xf32> to vector<2x2x4xf32>
    %30 = arith.mulf %28, %29 : vector<2x2x4xf32>
    %31 = vector.broadcast %13 : vector<1x2x4xf32> to vector<2x2x4xf32>
    %32 = vector.broadcast %14 : vector<2x1x4xf32> to vector<2x2x4xf32>
    %33 = arith.mulf %31, %32 : vector<2x2x4xf32>
    %34 = arith.addf %30, %33 : vector<2x2x4xf32>
    %cst_17 = arith.constant dense<0.000000e+00> : vector<2x2xf32>
    %35 = vector.multi_reduction <add>, %34, %cst_17 [2] : vector<2x2x4xf32> to vector<2x2xf32>
    %c1_18 = arith.constant 1 : index
    %c0_19 = arith.constant 0 : index
    %c0_20 = arith.constant 0 : index
    %36 = vector.load %arg4[%c1_18, %c0_19, %c0_20] : memref<2x1x2xf32, #tpu.memory_space<vmem>>, vector<1x1x2xf32>
    %37 = vector.shape_cast %36 : vector<1x1x2xf32> to vector<1x2xf32>
    %38 = vector.broadcast %37 : vector<1x2xf32> to vector<2x2xf32>
    %39 = arith.addf %35, %38 : vector<2x2xf32>
    %cst_21 = arith.constant 0.000000e+00 : f32
    %40 = vector.broadcast %cst_21 : f32 to vector<2x2xf32>
    %41 = arith.maximumf %27, %40 : vector<2x2xf32>
    %cst_22 = arith.constant 0.000000e+00 : f32
    %42 = vector.broadcast %cst_22 : f32 to vector<2x2xf32>
    %43 = arith.maximumf %39, %42 : vector<2x2xf32>
    %c0_23 = arith.constant 0 : index
    %c0_24 = arith.constant 0 : index
    %c0_25 = arith.constant 0 : index
    %44 = vector.load %arg5[%c0_23, %c0_24, %c0_25] : memref<2x4x2xf32, #tpu.memory_space<vmem>>, vector<1x4x2xf32>
    %45 = vector.shape_cast %44 : vector<1x4x2xf32> to vector<4x2xf32>
    %46 = vector.shape_cast %45 : vector<4x2xf32> to vector<1x4x2xf32>
    %c1_26 = arith.constant 1 : index
    %c0_27 = arith.constant 0 : index
    %c0_28 = arith.constant 0 : index
    %47 = vector.load %arg5[%c1_26, %c0_27, %c0_28] : memref<2x4x2xf32, #tpu.memory_space<vmem>>, vector<1x4x2xf32>
    %48 = vector.shape_cast %47 : vector<1x4x2xf32> to vector<4x2xf32>
    %49 = vector.shape_cast %48 : vector<4x2xf32> to vector<1x4x2xf32>
    %50 = vector.shape_cast %41 : vector<2x2xf32> to vector<2x1x2xf32>
    %51 = vector.shape_cast %43 : vector<2x2xf32> to vector<2x1x2xf32>
    %52 = vector.broadcast %46 : vector<1x4x2xf32> to vector<2x4x2xf32>
    %53 = vector.broadcast %50 : vector<2x1x2xf32> to vector<2x4x2xf32>
    %54 = arith.mulf %52, %53 : vector<2x4x2xf32>
    %55 = vector.broadcast %49 : vector<1x4x2xf32> to vector<2x4x2xf32>
    %56 = vector.broadcast %51 : vector<2x1x2xf32> to vector<2x4x2xf32>
    %57 = arith.mulf %55, %56 : vector<2x4x2xf32>
    %58 = arith.subf %54, %57 : vector<2x4x2xf32>
    %cst_29 = arith.constant dense<0.000000e+00> : vector<2x4xf32>
    %59 = vector.multi_reduction <add>, %58, %cst_29 [2] : vector<2x4x2xf32> to vector<2x4xf32>
    %c0_30 = arith.constant 0 : index
    %c0_31 = arith.constant 0 : index
    %c0_32 = arith.constant 0 : index
    %60 = vector.load %arg6[%c0_30, %c0_31, %c0_32] : memref<2x1x4xf32, #tpu.memory_space<vmem>>, vector<1x1x4xf32>
    %61 = vector.shape_cast %60 : vector<1x1x4xf32> to vector<1x4xf32>
    %62 = vector.broadcast %61 : vector<1x4xf32> to vector<2x4xf32>
    %63 = arith.addf %59, %62 : vector<2x4xf32>
    %64 = vector.broadcast %46 : vector<1x4x2xf32> to vector<2x4x2xf32>
    %65 = vector.broadcast %51 : vector<2x1x2xf32> to vector<2x4x2xf32>
    %66 = arith.mulf %64, %65 : vector<2x4x2xf32>
    %67 = vector.broadcast %49 : vector<1x4x2xf32> to vector<2x4x2xf32>
    %68 = vector.broadcast %50 : vector<2x1x2xf32> to vector<2x4x2xf32>
    %69 = arith.mulf %67, %68 : vector<2x4x2xf32>
    %70 = arith.addf %66, %69 : vector<2x4x2xf32>
    %cst_33 = arith.constant dense<0.000000e+00> : vector<2x4xf32>
    %71 = vector.multi_reduction <add>, %70, %cst_33 [2] : vector<2x4x2xf32> to vector<2x4xf32>
    %c1_34 = arith.constant 1 : index
    %c0_35 = arith.constant 0 : index
    %c0_36 = arith.constant 0 : index
    %72 = vector.load %arg6[%c1_34, %c0_35, %c0_36] : memref<2x1x4xf32, #tpu.memory_space<vmem>>, vector<1x1x4xf32>
    %73 = vector.shape_cast %72 : vector<1x1x4xf32> to vector<1x4xf32>
    %74 = vector.broadcast %73 : vector<1x4xf32> to vector<2x4xf32>
    %75 = arith.addf %71, %74 : vector<2x4xf32>
    %76 = arith.mulf %63, %63 : vector<2x4xf32>
    %77 = arith.mulf %75, %75 : vector<2x4xf32>
    %78 = arith.addf %76, %77 : vector<2x4xf32>
    %79 = math.sqrt %78 : vector<2x4xf32>
    %80 = arith.negf %79 : vector<2x4xf32>
    %81 = math.exp %80 : vector<2x4xf32>
    %cst_37 = arith.constant 1.000000e+00 : f32
    %82 = vector.broadcast %cst_37 : f32 to vector<2x4xf32>
    %83 = arith.addf %82, %81 : vector<2x4xf32>
    %84 = arith.divf %82, %83 : vector<2x4xf32>
    %cst_38 = arith.constant 0.000000e+00 : f32
    %85 = vector.broadcast %cst_38 : f32 to vector<2x4xf32>
    %86 = arith.cmpf ogt, %79, %85 : vector<2x4xf32>
    %cst_39 = arith.constant 1.000000e+00 : f32
    %87 = vector.broadcast %cst_39 : f32 to vector<2x4xf32>
    %88 = arith.select %86, %79, %87 : vector<2x4xi1>, vector<2x4xf32>
    %89 = arith.divf %84, %88 : vector<2x4xf32>
    %cst_40 = arith.constant 0.000000e+00 : f32
    %90 = vector.broadcast %cst_40 : f32 to vector<2x4xf32>
    %91 = arith.select %86, %89, %90 : vector<2x4xi1>, vector<2x4xf32>
    %92 = arith.mulf %63, %91 : vector<2x4xf32>
    %93 = arith.select %86, %92, %84 : vector<2x4xi1>, vector<2x4xf32>
    %94 = vector.shape_cast %93 : vector<2x4xf32> to vector<2x4x1xf32>
    %95 = arith.mulf %75, %91 : vector<2x4xf32>
    %96 = vector.shape_cast %95 : vector<2x4xf32> to vector<2x4x1xf32>
    %97 = vector.broadcast %94 : vector<2x4x1xf32> to vector<2x4x256xf32>
    %98 = arith.mulf %0, %97 : vector<2x4x256xf32>
    %99 = vector.broadcast %96 : vector<2x4x1xf32> to vector<2x4x256xf32>
    %100 = arith.mulf %1, %99 : vector<2x4x256xf32>
    %101 = arith.subf %98, %100 : vector<2x4x256xf32>
    %c0_41 = arith.constant 0 : index
    %c0_42 = arith.constant 0 : index
    %c0_43 = arith.constant 0 : index
    %102 = vector.load %arg7[%c0_41, %c0_42, %c0_43] : memref<2x4x256xf32, #tpu.memory_space<vmem>>, vector<2x4x256xf32>
    tpu.vector_store %arg7[%c0_41, %c0_42, %c0_43], %101 {strides = array<i32>} : memref<2x4x256xf32, #tpu.memory_space<vmem>>, vector<2x4x256xf32>,
    %103 = vector.broadcast %96 : vector<2x4x1xf32> to vector<2x4x256xf32>
    %104 = arith.mulf %0, %103 : vector<2x4x256xf32>
    %105 = vector.broadcast %94 : vector<2x4x1xf32> to vector<2x4x256xf32>
    %106 = arith.mulf %1, %105 : vector<2x4x256xf32>
    %107 = arith.addf %104, %106 : vector<2x4x256xf32>
    %c0_44 = arith.constant 0 : index
    %c0_45 = arith.constant 0 : index
    %c0_46 = arith.constant 0 : index
    %108 = vector.load %arg8[%c0_44, %c0_45, %c0_46] : memref<2x4x256xf32, #tpu.memory_space<vmem>>, vector<2x4x256xf32>
    tpu.vector_store %arg8[%c0_44, %c0_45, %c0_46], %107 {strides = array<i32>} : memref<2x4x256xf32, #tpu.memory_space<vmem>>, vector<2x4x256xf32>,
    return
  }
  func.func @transform_0(%arg0: i32) -> (i32, i32, i32) {
    %c0_i32 = arith.constant 0 : i32
    %c0_i32_0 = arith.constant 0 : i32
    %c0_i32_1 = arith.constant 0 : i32
    return %arg0, %c0_i32, %c0_i32_0 : i32, i32, i32
  }
  func.func @transform_1(%arg0: i32) -> (i32, i32, i32) {
    %c0_i32 = arith.constant 0 : i32
    %c0_i32_0 = arith.constant 0 : i32
    %c0_i32_1 = arith.constant 0 : i32
    return %arg0, %c0_i32, %c0_i32_0 : i32, i32, i32
  }
  func.func @transform_2(%arg0: i32) -> (i32, i32, i32) {
    %c0_i32 = arith.constant 0 : i32
    %c0_i32_0 = arith.constant 0 : i32
    %c0_i32_1 = arith.constant 0 : i32
    %c0_i32_2 = arith.constant 0 : i32
    return %c0_i32, %c0_i32_0, %c0_i32_1 : i32, i32, i32
  }
  func.func @transform_3(%arg0: i32) -> (i32, i32, i32) {
    %c0_i32 = arith.constant 0 : i32
    %c0_i32_0 = arith.constant 0 : i32
    %c0_i32_1 = arith.constant 0 : i32
    %c0_i32_2 = arith.constant 0 : i32
    return %c0_i32, %c0_i32_0, %c0_i32_1 : i32, i32, i32
  }
  func.func @transform_4(%arg0: i32) -> (i32, i32, i32) {
    %c0_i32 = arith.constant 0 : i32
    %c0_i32_0 = arith.constant 0 : i32
    %c0_i32_1 = arith.constant 0 : i32
    %c0_i32_2 = arith.constant 0 : i32
    return %c0_i32, %c0_i32_0, %c0_i32_1 : i32, i32, i32
  }
  func.func @transform_5(%arg0: i32) -> (i32, i32, i32) {
    %c0_i32 = arith.constant 0 : i32
    %c0_i32_0 = arith.constant 0 : i32
    %c0_i32_1 = arith.constant 0 : i32
    %c0_i32_2 = arith.constant 0 : i32
    return %c0_i32, %c0_i32_0, %c0_i32_1 : i32, i32, i32
  }
  func.func @transform_6(%arg0: i32) -> (i32, i32, i32) {
    %c0_i32 = arith.constant 0 : i32
    %c0_i32_0 = arith.constant 0 : i32
    %c0_i32_1 = arith.constant 0 : i32
    return %arg0, %c0_i32, %c0_i32_0 : i32, i32, i32
  }
  func.func @transform_7(%arg0: i32) -> (i32, i32, i32) {
    %c0_i32 = arith.constant 0 : i32
    %c0_i32_0 = arith.constant 0 : i32
    %c0_i32_1 = arith.constant 0 : i32
    return %arg0, %c0_i32, %c0_i32_0 : i32, i32, i32
  }
}

</mosaic_0001>

<llo_original>
// kernel: tpu_custom_call.1
$region0: #{tpu_custom_call.1}
  #allocation0 [shape = 'u32[]', space=smem, size = 0x4, offset = 0x4, fixed_abs, tag = 'smem constant byte address 0x4 - core index']
  #allocation1 [shape = 'u32[144,128]{1,0:T(1,128)}', space=vmem, size = 0x12000, scoped, tag = 'internal scratch']
  %s0 = inlined_call_operand.hbm [shape: f32[2,4,256], index: 0, kind: input, shape index: {}]
  %s1 = inlined_call_operand.hbm [shape: f32[2,4,256], index: 1, kind: input, shape index: {}]
  %s2 = inlined_call_operand.vmem [shape: f32[2,2,4], index: 2, kind: input, shape index: {}]
  %s3 = inlined_call_operand.vmem [shape: f32[2,1,2], index: 3, kind: input, shape index: {}]
  %s4 = inlined_call_operand.vmem [shape: f32[2,4,2], index: 4, kind: input, shape index: {}]
  %s5 = inlined_call_operand.vmem [shape: f32[2,1,4], index: 5, kind: input, shape index: {}]
  %s6 = inlined_call_operand.hbm [shape: f32[2,4,256], index: 6, kind: output, shape index: {0}]
  %s7 = inlined_call_operand.hbm [shape: f32[2,4,256], index: 7, kind: output, shape index: {1}]
  %8 = xla_tuple %s6, %s7
  %s9 = sld [smem:[#allocation0]]
  $region50: #{tpu_custom_call.1} parent=0
    _
  %s11 = ssub.s32 1, %s9
  %s12 = scalar_select 0, %s11, %s9
  $region1: #{tpu_custom_call.1} parent=0
    #allocation2 [shape = 'u8[8192]{0}', space=vmem, size = 0x2000, scoped, tag = 'input window, operand 0, single buffered']
    #allocation3 [shape = 's32[1]{0}', space=sflag, size = 0x4, scoped, tag = 'scoped memory for tpu_custom_call.1']
    #allocation4 [shape = 's32[1]{0}', space=sflag, size = 0x4, scoped, tag = 'scoped memory for tpu_custom_call.1']
    #allocation5 [shape = 'u8[8192]{0}', space=vmem, size = 0x2000, scoped, tag = 'input window, operand 1, single buffered']
    #allocation6 [shape = 's32[1]{0}', space=sflag, size = 0x4, scoped, tag = 'scoped memory for tpu_custom_call.1']
    #allocation7 [shape = 'u8[8192]{0}', space=vmem, size = 0x2000, scoped, tag = 'output window, operand 0, single buffered']
    #allocation8 [shape = 'u8[8192]{0}', space=vmem, size = 0x2000, scoped, tag = 'output window, operand 1, single buffered']
    #allocation9 [shape = 's32[1]{0}', space=sflag, size = 0x4, scoped, tag = 'scoped memory for tpu_custom_call.1']
    %13 = vsyncpa [#allocation3], 0
    %14 = vsyncpa [#allocation6], 0
    %15 = vsyncpa [#allocation4], 0
    %16 = vsyncpa [#allocation9], 0
    // Predicated region
    $region2: #{tpu_custom_call.1} parent=1 // pred_check
      _
    $region3: #{tpu_custom_call.1} parent=1 // pred_check_branch
      %18 = sbr.rel (0) target = $region5
    $region4: #{tpu_custom_call.1} parent=1 // pred_region
      %s20 = ssub.s32 256, 256
      %21 = vsyncadd [#allocation3], %s20
      %s22 = sshll.u32 [#allocation2], 4
      %s23 = int_to_ptr.vmem [resolvable:$true] %s22
      %28 = dma.hbm_to_vmem [thread:$0]  %s0, 256, %s23, [#allocation3], 128, 128, 8
    $region5: #{tpu_custom_call.1} parent=1 // pred_fallthru
      _
    // Predicated region
    $region6: #{tpu_custom_call.1} parent=1 // pred_check
      _
    $region7: #{tpu_custom_call.1} parent=1 // pred_check_branch
      %30 = sbr.rel (0) target = $region9
    $region8: #{tpu_custom_call.1} parent=1 // pred_region
      %s32 = ssub.s32 256, 256
      %33 = vsyncadd [#allocation6], %s32
      %s34 = sshll.u32 [#allocation5], 4
      %s35 = int_to_ptr.vmem [resolvable:$true] %s34
      %40 = dma.hbm_to_vmem [thread:$0]  %s1, 256, %s35, [#allocation6], 128, 128, 8
    $region9: #{tpu_custom_call.1} parent=1 // pred_fallthru
      _
    // Predicated region
    $region10: #{tpu_custom_call.1} parent=1 // pred_check
      _
    $region11: #{tpu_custom_call.1} parent=1 // pred_check_branch
      %42 = sbr.rel (0) target = $region13
    $region12: #{tpu_custom_call.1} parent=1 // pred_region
      _
    $region13: #{tpu_custom_call.1} parent=1 // pred_fallthru
      _
    // Predicated region
    $region14: #{tpu_custom_call.1} parent=1 // pred_check
      _
    $region15: #{tpu_custom_call.1} parent=1 // pred_check_branch
      %44 = sbr.rel (0) target = $region17
    $region16: #{tpu_custom_call.1} parent=1 // pred_region
      _
    $region17: #{tpu_custom_call.1} parent=1 // pred_fallthru
      _
    // Predicated region
    $region18: #{tpu_custom_call.1} parent=1 // pred_check
      _
    $region19: #{tpu_custom_call.1} parent=1 // pred_check_branch
      %46 = sbr.rel (0) target = $region21
    $region20: #{tpu_custom_call.1} parent=1 // pred_region
      _
    $region21: #{tpu_custom_call.1} parent=1 // pred_fallthru
      _
    // Predicated region
    $region22: #{tpu_custom_call.1} parent=1 // pred_check
      _
    $region23: #{tpu_custom_call.1} parent=1 // pred_check_branch
      %48 = sbr.rel (0) target = $region25
    $region24: #{tpu_custom_call.1} parent=1 // pred_region
      _
    $region25: #{tpu_custom_call.1} parent=1 // pred_fallthru
      _
    // Predicated region
    $region26: #{tpu_custom_call.1} parent=1 // pred_check
      _
    $region27: #{tpu_custom_call.1} parent=1 // pred_check_branch
      %50 = sbr.rel (0) target = $region29
    $region28: #{tpu_custom_call.1} parent=1 // pred_region
      %51 = dma.done [#allocation3], 256
    $region29: #{tpu_custom_call.1} parent=1 // pred_fallthru
      _
    // Predicated region
    $region30: #{tpu_custom_call.1} parent=1 // pred_check
      _
    $region31: #{tpu_custom_call.1} parent=1 // pred_check_branch
      %53 = sbr.rel (0) target = $region33
    $region32: #{tpu_custom_call.1} parent=1 // pred_region
      %54 = dma.done [#allocation6], 256
    $region33: #{tpu_custom_call.1} parent=1 // pred_fallthru
      _
    %v55 = vld [vmem:[#allocation2] sm:$0xff]
    %v56 = vld [vmem:[#allocation2 + $0x8] sm:$0xff]
    %v57 = vld [vmem:[#allocation5] sm:$0xff]
    %v58 = vld [vmem:[#allocation5 + $0x8] sm:$0xff]
    %v61 = vcombine.high %v55, %v55
    %v62 = vcombine.high %v56, %v56
    %vm65 = vcmask 1043456
    %v66 = vsel %vm65, %v55, 0.0
    %v67 = vsel %vm65, %v61, 0.0
    %v68 = vadd.f32 %v66, %v67
    %69 = vadd.xlane.f32.xlu0 %v68
    %v70 = vpop.xlane.xlu0 %69
    %v71 = vsel %vm65, %v56, 0.0
    %v72 = vsel %vm65, %v62, 0.0
    %v73 = vadd.f32 %v71, %v72
    %74 = vadd.xlane.f32.xlu0 %v73
    %v75 = vpop.xlane.xlu0 %74
    %v76 = vmul.f32 %v70, 0.00390625
    %v77 = vmul.f32 %v75, 0.00390625
    %v80 = vcombine.high %v57, %v57
    %v81 = vcombine.high %v58, %v58
    %v84 = vsel %vm65, %v57, 0.0
    %v85 = vsel %vm65, %v80, 0.0
    %v86 = vadd.f32 %v84, %v85
    %87 = vadd.xlane.f32.xlu0 %v86
    %v88 = vpop.xlane.xlu0 %87
    %v89 = vsel %vm65, %v58, 0.0
    %v90 = vsel %vm65, %v81, 0.0
    %v91 = vadd.f32 %v89, %v90
    %92 = vadd.xlane.f32.xlu0 %v91
    %v93 = vpop.xlane.xlu0 %92
    %v94 = vmul.f32 %v88, 0.00390625
    %v95 = vmul.f32 %v93, 0.00390625
    %v96 = vld [vmem:[%s2] sm:$0x3]
    %s97 = scalar_lea.vmem %s2, 2
    %v98 = vld [vmem:[%s97] sm:$0x3]
    %v101 = vlaneseq
    %v102 = vand.u32 %v101, 127
    %v103 = vlaneseq
    %v104 = vshrl.u32 %v103, 7
    %v105 = vsub.s32 %v102, %v104
    %v106 = vrot.slane %v76, %v105
    %v107 = vlaneseq
    %v108 = vshrl.u32 %v107, 7
    %v109 = vsub.s32 %v102, %v108
    %v110 = vrot.slane %v77, %v109
    %v113 = vmul.f32 %v96, %v106
    %v114 = vmul.f32 %v96, %v110
    %v117 = vlaneseq
    %v118 = vshrl.u32 %v117, 7
    %v119 = vsub.s32 %v102, %v118
    %v120 = vrot.slane %v94, %v119
    %v121 = vlaneseq
    %v122 = vshrl.u32 %v121, 7
    %v123 = vsub.s32 %v102, %v122
    %v124 = vrot.slane %v95, %v123
    %v127 = vmul.f32 %v98, %v120
    %v128 = vmul.f32 %v98, %v124
    %v129 = vsub.f32 %v113, %v127
    %v130 = vsub.f32 %v114, %v128
    %vm131 = vcmask 25600
    %v132 = vsel %vm131, %v129, 0.0
    %133 = vadd.xlane.f32.xlu0 %v132
    %v134 = vpop.xlane.xlu0 %133
    %v135 = vsel %vm131, %v130, 0.0
    %136 = vadd.xlane.f32.xlu0 %v135
    %v137 = vpop.xlane.xlu0 %136
    %v138 = vld [vmem:[%s3] sm:$0x1]
    %v140 = vlaneseq
    %v141 = vshrl.u32 %v140, 7
    %v142 = vsub.s32 0, %v141
    %v143 = vrot.slane %v138, %v142
    %145 = vbcast.lane.b32.xlu0 %v143, 256
    %v146 = vpop.permute.xlu0 %145
    %v148 = vadd.f32 %v134, %v146
    %v149 = vadd.f32 %v137, %v146
    %v150 = vmul.f32 %v96, %v120
    %v151 = vmul.f32 %v96, %v124
    %v152 = vmul.f32 %v98, %v106
    %v153 = vmul.f32 %v98, %v110
    %v154 = vadd.f32 %v150, %v152
    %v155 = vadd.f32 %v151, %v153
    %v156 = vsel %vm131, %v154, 0.0
    %157 = vadd.xlane.f32.xlu0 %v156
    %v158 = vpop.xlane.xlu0 %157
    %v159 = vsel %vm131, %v155, 0.0
    %160 = vadd.xlane.f32.xlu0 %v159
    %v161 = vpop.xlane.xlu0 %160
    %s162 = scalar_lea.vmem %s3, 1
    %v163 = vld [vmem:[%s162] sm:$0x1]
    %v165 = vlaneseq
    %v166 = vshrl.u32 %v165, 7
    %v167 = vsub.s32 0, %v166
    %v168 = vrot.slane %v163, %v167
    %170 = vbcast.lane.b32.xlu0 %v168, 256
    %v171 = vpop.permute.xlu0 %170
    %v173 = vadd.f32 %v158, %v171
    %v174 = vadd.f32 %v161, %v171
    %v175 = vmax.f32 %v148, 0.0
    %v176 = vmax.f32 %v149, 0.0
    %v177 = vmax.f32 %v173, 0.0
    %v178 = vmax.f32 %v174, 0.0
    %v179 = vld [vmem:[%s4] sm:$0xf]
    %s180 = scalar_lea.vmem %s4, 4
    %v181 = vld [vmem:[%s180] sm:$0xf]
    %184 = vset.pattern.permute.xlu0 0
    %185 = vperm.xlu0 %184, %v175
    %v186 = vpop.permute.xlu0 %185
    %187 = vset.pattern.permute.xlu0 0
    %188 = vperm.xlu0 %187, %v176
    %v189 = vpop.permute.xlu0 %188
    %v190 = vlaneseq
    %v191 = vshrl.u32 %v190, 7
    %v192 = vsub.s32 %v102, %v191
    %v193 = vrot.slane %v186, %v192
    %v194 = vlaneseq
    %v195 = vshrl.u32 %v194, 7
    %v196 = vsub.s32 %v102, %v195
    %v197 = vrot.slane %v189, %v196
    %vm198 = vcmask 1042434
    %v199 = vsel %vm198, %v193, %v193
    %vm200 = vcmask 1043459
    %v201 = vsel %vm200, %v193, %v199
    %v202 = vsel %vm198, %v197, %v197
    %v203 = vsel %vm200, %v197, %v202
    %v206 = vmul.f32 %v179, %v201
    %v207 = vmul.f32 %v179, %v203
    %210 = vset.pattern.permute.xlu0 0
    %211 = vperm.xlu0 %210, %v177
    %v212 = vpop.permute.xlu0 %211
    %213 = vset.pattern.permute.xlu0 0
    %214 = vperm.xlu0 %213, %v178
    %v215 = vpop.permute.xlu0 %214
    %v216 = vlaneseq
    %v217 = vshrl.u32 %v216, 7
    %v218 = vsub.s32 %v102, %v217
    %v219 = vrot.slane %v212, %v218
    %v220 = vlaneseq
    %v221 = vshrl.u32 %v220, 7
    %v222 = vsub.s32 %v102, %v221
    %v223 = vrot.slane %v215, %v222
    %v224 = vsel %vm198, %v219, %v219
    %v225 = vsel %vm200, %v219, %v224
    %v226 = vsel %vm198, %v223, %v223
    %v227 = vsel %vm200, %v223, %v226
    %v230 = vmul.f32 %v181, %v225
    %v231 = vmul.f32 %v181, %v227
    %v232 = vsub.f32 %v206, %v230
    %v233 = vsub.f32 %v207, %v231
    %vm234 = vcmask 11264
    %v235 = vsel %vm234, %v232, 0.0
    %236 = vadd.xlane.f32.xlu0 %v235
    %v237 = vpop.xlane.xlu0 %236
    %v238 = vsel %vm234, %v233, 0.0
    %239 = vadd.xlane.f32.xlu0 %v238
    %v240 = vpop.xlane.xlu0 %239
    %v241 = vld [vmem:[%s5] sm:$0x1]
    %v243 = vlaneseq
    %v244 = vshrl.u32 %v243, 7
    %v245 = vsub.s32 0, %v244
    %v246 = vrot.slane %v241, %v245
    %248 = vbcast.lane.b32.xlu0 %v246, 256
    %v249 = vpop.permute.xlu0 %248
    %v251 = vadd.f32 %v237, %v249
    %v252 = vadd.f32 %v240, %v249
    %v253 = vmul.f32 %v179, %v225
    %v254 = vmul.f32 %v179, %v227
    %v255 = vmul.f32 %v181, %v201
    %v256 = vmul.f32 %v181, %v203
    %v257 = vadd.f32 %v253, %v255
    %v258 = vadd.f32 %v254, %v256
    %v259 = vsel %vm234, %v257, 0.0
    %260 = vadd.xlane.f32.xlu0 %v259
    %v261 = vpop.xlane.xlu0 %260
    %v262 = vsel %vm234, %v258, 0.0
    %263 = vadd.xlane.f32.xlu0 %v262
    %v264 = vpop.xlane.xlu0 %263
    %s265 = scalar_lea.vmem %s5, 1
    %v266 = vld [vmem:[%s265] sm:$0x1]
    %v268 = vlaneseq
    %v269 = vshrl.u32 %v268, 7
    %v270 = vsub.s32 0, %v269
    %v271 = vrot.slane %v266, %v270
    %273 = vbcast.lane.b32.xlu0 %v271, 256
    %v274 = vpop.permute.xlu0 %273
    %v276 = vadd.f32 %v261, %v274
    %v277 = vadd.f32 %v264, %v274
    %v278 = vmul.f32 %v251, %v251
    %v279 = vmul.f32 %v252, %v252
    %v280 = vmul.f32 %v276, %v276
    %v281 = vmul.f32 %v277, %v277
    %v282 = vadd.f32 %v278, %v280
    %v283 = vadd.f32 %v279, %v281
    %v284 = vrsqrt.pop %v282
    %v285 = vmul.f32 %v282, %v284
    %vm286 = vcmp.eq.f32.partialorder %v282, inf
    %v287 = vsel %vm286, %v282, %v285
    %vm288 = vcmp.eq.f32.partialorder %v282, 0.0
    %v289 = vand.u32 %v282, 2147483648
    %v290 = vsel %vm288, %v289, %v287
    %v291 = vrsqrt.pop %v283
    %v292 = vmul.f32 %v283, %v291
    %vm293 = vcmp.eq.f32.partialorder %v283, inf
    %v294 = vsel %vm293, %v283, %v292
    %vm295 = vcmp.eq.f32.partialorder %v283, 0.0
    %v296 = vand.u32 %v283, 2147483648
    %v297 = vsel %vm295, %v296, %v294
    %v298 = vxor.u32 %v290, 2147483648
    %v299 = vxor.u32 %v297, 2147483648
    %v300 = vmul.f32 %v298, 1.442695
    %v301 = vpow.pop %v300
    %v302 = vmul.f32 %v299, 1.442695
    %v303 = vpow.pop %v302
    %v304 = vadd.f32 %v301, 1.0
    %v305 = vadd.f32 %v303, 1.0
    %v306 = vrcp.pop %v304
    %v307 = vmul.f32 1.0, %v306
    %v308 = vrcp.pop %v305
    %v309 = vmul.f32 1.0, %v308
    %vm310 = vcmp.gt.f32.partialorder %v290, 0.0
    %vm311 = vcmp.gt.f32.partialorder %v297, 0.0
    %v312 = vsel %vm310, %v290, 1.0
    %v313 = vsel %vm311, %v297, 1.0
    %v314 = vrcp.pop %v312
    %v315 = vmul.f32 %v307, %v314
    %v316 = vrcp.pop %v313
    %v317 = vmul.f32 %v309, %v316
    %v318 = vsel %vm310, %v315, 0.0
    %v319 = vsel %vm311, %v317, 0.0
    %v320 = vmul.f32 %v251, %v318
    %v321 = vmul.f32 %v252, %v319
    %v322 = vsel %vm310, %v320, %v307
    %v323 = vsel %vm311, %v321, %v309
    %v324 = vmul.f32 %v276, %v318
    %v325 = vmul.f32 %v277, %v319
    %327 = vset.pattern.permute.xlu0 0
    %328 = vperm.xlu0 %327, %v322
    %v329 = vpop.permute.xlu0 %328
    %331 = vset.pattern.permute.xlu0 0
    %332 = vperm.xlu0 %331, %v323
    %v333 = vpop.permute.xlu0 %332
    %v335 = vunpack.c.l.s4 839922192
    %v336 = vunpack.c.0.s8 %v335
    %v337 = vlaneseq
    %v338 = vshrl.u32 %v337, 7
    %v339 = vsub.s32 %v336, %v338
    %v340 = vrot.slane %v329, %v339
    %v342 = vunpack.c.l.s4 839922192
    %v343 = vunpack.c.0.s8 %v342
    %v344 = vlaneseq
    %v345 = vshrl.u32 %v344, 7
    %v346 = vsub.s32 %v343, %v345
    %v347 = vrot.slane %v333, %v346
    %v350 = vmul.f32 %v55, %v340
    %v351 = vmul.f32 %v56, %v347
    %353 = vset.pattern.permute.xlu0 0
    %354 = vperm.xlu0 %353, %v324
    %v355 = vpop.permute.xlu0 %354
    %357 = vset.pattern.permute.xlu0 0
    %358 = vperm.xlu0 %357, %v325
    %v359 = vpop.permute.xlu0 %358
    %v361 = vunpack.c.l.s4 839922192
    %v362 = vunpack.c.0.s8 %v361
    %v363 = vlaneseq
    %v364 = vshrl.u32 %v363, 7
    %v365 = vsub.s32 %v362, %v364
    %v366 = vrot.slane %v355, %v365
    %v368 = vunpack.c.l.s4 839922192
    %v369 = vunpack.c.0.s8 %v368
    %v370 = vlaneseq
    %v371 = vshrl.u32 %v370, 7
    %v372 = vsub.s32 %v369, %v371
    %v373 = vrot.slane %v359, %v372
    %v376 = vmul.f32 %v57, %v366
    %v377 = vmul.f32 %v58, %v373
    %v378 = vsub.f32 %v350, %v376
    %v379 = vsub.f32 %v351, %v377
    %380 = vst [vmem:[#allocation7] sm:$0xff] %v378
    %381 = vst [vmem:[#allocation7 + $0x8] sm:$0xff] %v379
    %v382 = vmul.f32 %v55, %v366
    %v383 = vmul.f32 %v56, %v373
    %v384 = vmul.f32 %v57, %v340
    %v385 = vmul.f32 %v58, %v347
    %v386 = vadd.f32 %v382, %v384
    %v387 = vadd.f32 %v383, %v385
    %388 = vst [vmem:[#allocation8] sm:$0xff] %v386
    %389 = vst [vmem:[#allocation8 + $0x8] sm:$0xff] %v387
    // Predicated region
    $region34: #{tpu_custom_call.1} parent=1 // pred_check
      _
    $region35: #{tpu_custom_call.1} parent=1 // pred_check_branch
      %391 = sbr.rel (0) target = $region37
    $region36: #{tpu_custom_call.1} parent=1 // pred_region
      %s393 = ssub.s32 256, 256
      %394 = vsyncadd [#allocation4], %s393
      %s395 = sshll.u32 [#allocation7], 4
      %s396 = int_to_ptr.vmem [resolvable:$true] %s395
      %401 = dma.vmem_to_hbm [thread:$0]  %s396, 256, %s6, [#allocation4], 128, 128, 8
    $region37: #{tpu_custom_call.1} parent=1 // pred_fallthru
      _
    // Predicated region
    $region38: #{tpu_custom_call.1} parent=1 // pred_check
      _
    $region39: #{tpu_custom_call.1} parent=1 // pred_check_branch
      %403 = sbr.rel (0) target = $region41
    $region40: #{tpu_custom_call.1} parent=1 // pred_region
      %s405 = ssub.s32 256, 256
      %406 = vsyncadd [#allocation9], %s405
      %s407 = sshll.u32 [#allocation8], 4
      %s408 = int_to_ptr.vmem [resolvable:$true] %s407
      %413 = dma.vmem_to_hbm [thread:$0]  %s408, 256, %s7, [#allocation9], 128, 128, 8
    $region41: #{tpu_custom_call.1} parent=1 // pred_fallthru
      _
    // Predicated region
    $region42: #{tpu_custom_call.1} parent=1 // pred_check
      _
    $region43: #{tpu_custom_call.1} parent=1 // pred_check_branch
      %415 = sbr.rel (0) target = $region45
    $region44: #{tpu_custom_call.1} parent=1 // pred_region
      %416 = dma.done [#allocation4], 256
    $region45: #{tpu_custom_call.1} parent=1 // pred_fallthru
      _
    // Predicated region
    $region46: #{tpu_custom_call.1} parent=1 // pred_check
      _
    $region47: #{tpu_custom_call.1} parent=1 // pred_check_branch
      %418 = sbr.rel (0) target = $region49
    $region48: #{tpu_custom_call.1} parent=1 // pred_region
      %419 = dma.done [#allocation9], 256
    $region49: #{tpu_custom_call.1} parent=1 // pred_fallthru
      _
    %420 = vsyncpa [#allocation3], 1
    %421 = vsyncpa [#allocation6], 1
    %422 = vsyncpa [#allocation4], 1
    %423 = vsyncpa [#allocation9], 1

</llo_original>
